<compile_context>
chip_gen: v7x
topology: tpu7x:2x2x1
jax: 0.10.0
libtpu: 0.0.40
codegen_flags: <defaults>
</compile_context>

<pallas_src>
import functools
import math

import jax
import jax.numpy as jnp
from jax import lax
from jax.experimental import pallas as pl
from jax.experimental.pallas import tpu as pltpu

LANES = 128
SUBLANES = 8


def _round_up(x, m):
    return ((x + m - 1) // m) * m


def _lcm(a, b):
    return a * b // math.gcd(a, b)


def _detect_ncores():
    """2 accumulator slots / parallel cores on v7x-like chips, else 1."""
    try:
        kind = jax.devices()[0].device_kind.lower()
    except Exception:
        return 1
    return 2 if "v7" in kind else 1


def _quantile_loss_kernel(preds_ref, target_ref, w_ref, out_ref, *,
                          tiles_per_core, tile_rows, valid_rows, need_mask):
    c = pl.program_id(0)
    i = pl.program_id(1)

    @pl.when(i == 0)
    def _():
        out_ref[...] = jnp.zeros_like(out_ref)

    # Compute in f32 (required on v5e's no-bf16 VPU; free here, HBM-bound).
    t = target_ref[...].astype(jnp.float32)
    p = preds_ref[...].astype(jnp.float32)
    e = t - p

    # pinball(q, e) = max((q-1)*e, q*e) = q*e + max(-e, 0), with the periodic
    # quantile weight supplied by the resident (tile_rows, 128) weight block.
    contrib = w_ref[...] * e + jnp.maximum(-e, 0.0)

    if need_mask:
        # Mask rows past the true array extent (garbage from the partial /
        # out-of-range last block).  Static threshold, scalar block offset.
        base_row = (c * tiles_per_core + i) * tile_rows
        row = base_row + lax.broadcasted_iota(jnp.int32, (tile_rows, LANES), 0)
        contrib = jnp.where(row < valid_rows, contrib, 0.0)

    # Reduce the tile to one vreg-shaped (8, 128) partial using only
    # elementwise adds across vreg groups (no XLU work), and accumulate into
    # the per-core resident output block.
    partial = contrib.reshape(tile_rows // SUBLANES, SUBLANES, LANES).sum(axis=0)
    out_ref[...] += partial[None, :, :]


def quantile_loss(preds, target, quantiles, *, tile_rows=2048):
    """preds, target: [B, Q]; quantiles: length-Q Python list. Returns scalar f32."""
    B, Q = preds.shape
    assert target.shape == (B, Q)
    quantiles = [float(q) for q in quantiles]
    assert len(quantiles) == Q

    N = B * Q
    ncores = _detect_ncores()

    # The flat-index weight pattern repeats every Q / gcd(Q, 128) sublane-rows;
    # the tile row count must be a multiple of that (so one resident weight
    # block serves every tile) and of 32 (min sublane tile for f32/bf16/int8).
    period = Q // math.gcd(Q, LANES)
    unit = _lcm(32, period)

    rows_needed = -(-N // LANES)                       # cdiv(B*Q, 128)
    tr = _round_up(min(max(tile_rows, 1), rows_needed), unit)

    # Array row count: at least one full tile so no block exceeds the array.
    # For large inputs with B*Q % 128 == 0 this is a zero-copy reshape (no pad
    # at all); otherwise only a <128-element (or, for tiny inputs, <1-tile) pad.
    rows_arr = max(rows_needed, tr)
    n_pad = rows_arr * LANES

    total_blocks = -(-rows_arr // tr)
    tiles_per_core = -(-total_blocks // ncores)
    need_mask = (total_blocks * tr != rows_arr) or (ncores * tiles_per_core != total_blocks)

    def _prep(x):
        flat = x.reshape(-1)                           # free: contiguous row-major
        if n_pad != N:
            flat = jnp.pad(flat, (0, n_pad - N))       # zeros contribute 0 loss
        return flat.reshape(rows_arr, LANES)

    preds_l = _prep(preds)
    target_l = _prep(target)

    # Resident periodic weight block: weight of flat element k is quantiles[k % Q].
    w_tile = jnp.tile(jnp.asarray(quantiles, dtype=jnp.float32),
                      (tr * LANES) // Q).reshape(tr, LANES)

    kernel = functools.partial(
        _quantile_loss_kernel,
        tiles_per_core=tiles_per_core,
        tile_rows=tr,
        valid_rows=rows_arr,
        need_mask=need_mask,
    )

    last_blk = total_blocks - 1
    if ncores * tiles_per_core == total_blocks:
        data_map = lambda c, i: (c * tiles_per_core + i, 0)
    else:
        # Clamp so the trailing (masked-to-zero) blocks of the last core never
        # issue an out-of-bounds DMA.
        data_map = lambda c, i: (jnp.minimum(c * tiles_per_core + i, last_blk), 0)
    w_map = lambda c, i: (0, 0)

    elt = preds_l.dtype.itemsize
    cost = pl.CostEstimate(
        flops=6 * n_pad,
        transcendentals=0,
        bytes_accessed=2 * n_pad * elt + tr * LANES * 4 + ncores * SUBLANES * LANES * 4,
    )

    partials = pl.pallas_call(
        kernel,
        out_shape=jax.ShapeDtypeStruct((ncores, SUBLANES, LANES), jnp.float32),
        grid_spec=pltpu.PrefetchScalarGridSpec(
            num_scalar_prefetch=0,
            grid=(ncores, tiles_per_core),
            in_specs=[
                pl.BlockSpec((tr, LANES), data_map),   # preds tiles
                pl.BlockSpec((tr, LANES), data_map),   # target tiles
                pl.BlockSpec((tr, LANES), w_map),      # resident weight block
            ],
            # Per-core resident accumulator block.
            out_specs=pl.BlockSpec((1, SUBLANES, LANES), lambda c, i: (c, 0, 0)),
        ),
        compiler_params=pltpu.CompilerParams(
            dimension_semantics=("parallel", "arbitrary"),
            vmem_limit_bytes=48 * 1024 * 1024,
        ),
        cost_estimate=cost,
    )(preds_l, target_l, w_tile)

    # Tiny epilogue: reduce the (ncores, 8, 128) partials and take the batch mean.
    return jnp.sum(partials) / jnp.float32(B)


def quantile_loss_ref(preds, target, quantiles):
    """Pure-JAX reference matching the PyTorch module."""
    q = jnp.asarray(quantiles, dtype=jnp.float32)[None, :]   # (1, Q)
    e = target.astype(jnp.float32) - preds.astype(jnp.float32)
    pinball = jnp.maximum((q - 1.0) * e, q * e)
    return jnp.mean(jnp.sum(pinball, axis=1))


if __name__ == "__main__":
    key = jax.random.PRNGKey(0)
    quantiles = [0.1, 0.5, 0.9]
    B, Q = 16, len(quantiles)

    k1, k2 = jax.random.split(key)
    preds = jax.random.normal(k1, (B, Q), dtype=jnp.float32)
    target = jax.random.normal(k2, (B, Q), dtype=jnp.float32)

    out = jax.block_until_ready(quantile_loss(preds, target, quantiles))
    ref = quantile_loss_ref(preds, target, quantiles)
    assert jnp.allclose(out, ref, rtol=1e-5, atol=1e-5), (out, ref)

    print("KERNEL_OK")
</pallas_src>

<mosaic_0001>
module attributes {stable_mosaic.version = 11 : i64} {
  func.func @_quantile_loss_kernel(%arg0: i32, %arg1: i32, %arg2: memref<96x128xf32, #tpu.memory_space<vmem>>, %arg3: memref<96x128xf32, #tpu.memory_space<vmem>>, %arg4: memref<96x128xf32, #tpu.memory_space<vmem>>, %arg5: memref<1x8x128xf32, #tpu.memory_space<vmem>>) attributes {dimension_semantics = [#tpu.dimension_semantics<parallel>, #tpu.dimension_semantics<arbitrary>], iteration_bounds = array<i64: 1, 1>, scalar_prefetch = 0 : i64, scratch_operands = 0 : i64, tpu.core_type = #tpu.core_type<tc>, window_params = [{transform_indices = @transform_0, window_bounds = array<i64: 96, 128>}, {transform_indices = @transform_1, window_bounds = array<i64: 96, 128>}, {pipeline_mode = #tpu.pipeline_mode<synchronous>, transform_indices = @transform_2, window_bounds = array<i64: 96, 128>}, {transform_indices = @transform_3, window_bounds = array<i64: 1, 8, 128>}]} {
    %c0_i32 = arith.constant 0 : i32
    %0 = arith.cmpi eq, %arg1, %c0_i32 : i32
    %1 = arith.extui %0 : i1 to i32
    %c0_i32_0 = arith.constant 0 : i32
    %2 = arith.cmpi ne, %1, %c0_i32_0 : i32
    scf.if %2 {
      %cst_14 = arith.constant 0.000000e+00 : f32
      %19 = vector.broadcast %cst_14 : f32 to vector<1x8x128xf32>
      %c0_15 = arith.constant 0 : index
      %c0_16 = arith.constant 0 : index
      %c0_17 = arith.constant 0 : index
      %20 = vector.load %arg5[%c0_15, %c0_16, %c0_17] : memref<1x8x128xf32, #tpu.memory_space<vmem>>, vector<1x8x128xf32>
      tpu.vector_store %arg5[%c0_15, %c0_16, %c0_17], %19 {strides = array<i32>} : memref<1x8x128xf32, #tpu.memory_space<vmem>>, vector<1x8x128xf32>,
    } else {
    }
    %c0 = arith.constant 0 : index
    %c0_1 = arith.constant 0 : index
    %3 = vector.load %arg3[%c0, %c0_1] : memref<96x128xf32, #tpu.memory_space<vmem>>, vector<96x128xf32>
    %c0_2 = arith.constant 0 : index
    %c0_3 = arith.constant 0 : index
    %4 = vector.load %arg2[%c0_2, %c0_3] : memref<96x128xf32, #tpu.memory_space<vmem>>, vector<96x128xf32>
    %5 = arith.subf %3, %4 : vector<96x128xf32>
    %c0_4 = arith.constant 0 : index
    %c0_5 = arith.constant 0 : index
    %6 = vector.load %arg4[%c0_4, %c0_5] : memref<96x128xf32, #tpu.memory_space<vmem>>, vector<96x128xf32>
    %7 = arith.mulf %6, %5 : vector<96x128xf32>
    %cst = arith.constant 0.000000e+00 : f32
    %8 = vector.broadcast %cst : f32 to vector<96x128xf32>
    %9 = arith.subf %8, %5 : vector<96x128xf32>
    %cst_6 = arith.constant 0.000000e+00 : f32
    %10 = vector.broadcast %cst_6 : f32 to vector<96x128xf32>
    %11 = arith.maximumf %9, %10 : vector<96x128xf32>
    %12 = arith.addf %7, %11 : vector<96x128xf32>
    %13 = vector.shape_cast %12 : vector<96x128xf32> to vector<12x8x128xf32>
    %cst_7 = arith.constant dense<0.000000e+00> : vector<8x128xf32>
    %14 = vector.multi_reduction <add>, %13, %cst_7 [0] : vector<12x8x128xf32> to vector<8x128xf32>
    %c0_8 = arith.constant 0 : index
    %c0_9 = arith.constant 0 : index
    %c0_10 = arith.constant 0 : index
    %15 = vector.load %arg5[%c0_8, %c0_9, %c0_10] : memref<1x8x128xf32, #tpu.memory_space<vmem>>, vector<1x8x128xf32>
    %16 = vector.shape_cast %14 : vector<8x128xf32> to vector<1x8x128xf32>
    %17 = arith.addf %15, %16 : vector<1x8x128xf32>
    %c0_11 = arith.constant 0 : index
    %c0_12 = arith.constant 0 : index
    %c0_13 = arith.constant 0 : index
    %18 = vector.load %arg5[%c0_11, %c0_12, %c0_13] : memref<1x8x128xf32, #tpu.memory_space<vmem>>, vector<1x8x128xf32>
    tpu.vector_store %arg5[%c0_11, %c0_12, %c0_13], %17 {strides = array<i32>} : memref<1x8x128xf32, #tpu.memory_space<vmem>>, vector<1x8x128xf32>,
    return
  }
  func.func @transform_0(%arg0: i32, %arg1: i32) -> (i32, i32) {
    %c1_i32 = arith.constant 1 : i32
    %0 = arith.muli %arg0, %c1_i32 : i32
    %1 = arith.addi %0, %arg1 : i32
    %c0_i32 = arith.constant 0 : i32
    %c0_i32_0 = arith.constant 0 : i32
    return %1, %c0_i32 : i32, i32
  }
  func.func @transform_1(%arg0: i32, %arg1: i32) -> (i32, i32) {
    %c1_i32 = arith.constant 1 : i32
    %0 = arith.muli %arg0, %c1_i32 : i32
    %1 = arith.addi %0, %arg1 : i32
    %c0_i32 = arith.constant 0 : i32
    %c0_i32_0 = arith.constant 0 : i32
    return %1, %c0_i32 : i32, i32
  }
  func.func @transform_2(%arg0: i32, %arg1: i32) -> (i32, i32) {
    %c0_i32 = arith.constant 0 : i32
    %c0_i32_0 = arith.constant 0 : i32
    %c0_i32_1 = arith.constant 0 : i32
    return %c0_i32, %c0_i32_0 : i32, i32
  }
  func.func @transform_3(%arg0: i32, %arg1: i32) -> (i32, i32, i32) {
    %c0_i32 = arith.constant 0 : i32
    %c0_i32_0 = arith.constant 0 : i32
    %c0_i32_1 = arith.constant 0 : i32
    return %arg0, %c0_i32, %c0_i32_0 : i32, i32, i32
  }
}

</mosaic_0001>

<llo_original>
// kernel: tpu_custom_call.1
$region0: #{tpu_custom_call.1}
  #allocation0 [shape = 'u32[]', space=smem, size = 0x4, offset = 0x4, fixed_abs, tag = 'smem constant byte address 0x4 - core index']
  #allocation1 [shape = 'u32[144,128]{1,0:T(1,128)}', space=vmem, size = 0x12000, scoped, tag = 'internal scratch']
  %s0 = inlined_call_operand.hbm [shape: f32[96,128], index: 0, kind: input, shape index: {}]
  %s1 = inlined_call_operand.hbm [shape: f32[96,128], index: 1, kind: input, shape index: {}]
  %s2 = inlined_call_operand.hbm [shape: f32[96,128], index: 2, kind: input, shape index: {}]
  %s3 = inlined_call_operand.hbm [shape: f32[1,8,128], index: 3, kind: output, shape index: {}]
  %s4 = sld [smem:[#allocation0]]
  $region38: #{tpu_custom_call.1} parent=0
    _
  %s6 = ssub.s32 1, %s4
  %s7 = scalar_select 0, %s6, %s4
  $region1: #{tpu_custom_call.1} parent=0
    #allocation2 [shape = 'u8[49152]{0}', space=vmem, size = 0xc000, scoped, tag = 'input window, operand 0, single buffered']
    #allocation3 [shape = 's32[1]{0}', space=sflag, size = 0x4, scoped, tag = 'scoped memory for tpu_custom_call.1']
    #allocation4 [shape = 's32[1]{0}', space=sflag, size = 0x4, scoped, tag = 'scoped memory for tpu_custom_call.1']
    #allocation5 [shape = 'u8[49152]{0}', space=vmem, size = 0xc000, scoped, tag = 'input window, operand 1, single buffered']
    #allocation6 [shape = 's32[1]{0}', space=sflag, size = 0x4, scoped, tag = 'scoped memory for tpu_custom_call.1']
    #allocation7 [shape = 'u8[49152]{0}', space=vmem, size = 0xc000, scoped, tag = 'input window, operand 2, single buffered']
    #allocation8 [shape = 'u8[4096]{0}', space=vmem, size = 0x1000, scoped, tag = 'output window, operand 0, single buffered']
    %8 = vsyncpa [#allocation3], 0
    %9 = vsyncpa [#allocation6], 0
    %10 = vsyncpa [#allocation4], 0
    // Predicated region
    $region2: #{tpu_custom_call.1} parent=1 // pred_check
      _
    $region3: #{tpu_custom_call.1} parent=1 // pred_check_branch
      %12 = sbr.rel (0) target = $region5
    $region4: #{tpu_custom_call.1} parent=1 // pred_region
      %s13 = sadd.s32 0, 0
      %s14 = smul.u32 12, %s13
      %s16 = ssub.s32 1536, 1536
      %17 = vsyncadd [#allocation3], %s16
      %s18 = smul.addr %s14, 128
      %s19 = scalar_lea.hbm %s0, %s18
      %s20 = sshll.u32 [#allocation2], 4
      %s21 = int_to_ptr.vmem [resolvable:$true] %s20
      %26 = dma.hbm_to_vmem [thread:$0]  %s19, 1536, %s21, [#allocation3], 128, 128, 8
    $region5: #{tpu_custom_call.1} parent=1 // pred_fallthru
      _
    // Predicated region
    $region6: #{tpu_custom_call.1} parent=1 // pred_check
      _
    $region7: #{tpu_custom_call.1} parent=1 // pred_check_branch
      %28 = sbr.rel (0) target = $region9
    $region8: #{tpu_custom_call.1} parent=1 // pred_region
      %s29 = sadd.s32 0, 0
      %s30 = smul.u32 12, %s29
      %s32 = ssub.s32 1536, 1536
      %33 = vsyncadd [#allocation6], %s32
      %s34 = smul.addr %s30, 128
      %s35 = scalar_lea.hbm %s1, %s34
      %s36 = sshll.u32 [#allocation5], 4
      %s37 = int_to_ptr.vmem [resolvable:$true] %s36
      %42 = dma.hbm_to_vmem [thread:$0]  %s35, 1536, %s37, [#allocation6], 128, 128, 8
    $region9: #{tpu_custom_call.1} parent=1 // pred_fallthru
      _
    // Predicated region
    $region10: #{tpu_custom_call.1} parent=1 // pred_check
      _
    $region11: #{tpu_custom_call.1} parent=1 // pred_check_branch
      %44 = sbr.rel (0) target = $region13
    $region12: #{tpu_custom_call.1} parent=1 // pred_region
      %s46 = ssub.s32 1536, 1536
      %47 = vsyncadd [#allocation6], %s46
      %s48 = sshll.u32 [#allocation7], 4
      %s49 = int_to_ptr.vmem [resolvable:$true] %s48
      %54 = dma.hbm_to_vmem [thread:$0]  %s2, 1536, %s49, [#allocation6], 128, 128, 8
    $region13: #{tpu_custom_call.1} parent=1 // pred_fallthru
      _
    // Predicated region
    $region14: #{tpu_custom_call.1} parent=1 // pred_check
      _
    $region15: #{tpu_custom_call.1} parent=1 // pred_check_branch
      %56 = sbr.rel (0) target = $region17
    $region16: #{tpu_custom_call.1} parent=1 // pred_region
      %57 = dma.done [#allocation3], 1536
    $region17: #{tpu_custom_call.1} parent=1 // pred_fallthru
      _
    // Predicated region
    $region18: #{tpu_custom_call.1} parent=1 // pred_check
      _
    $region19: #{tpu_custom_call.1} parent=1 // pred_check_branch
      %59 = sbr.rel (0) target = $region21
    $region20: #{tpu_custom_call.1} parent=1 // pred_region
      %60 = dma.done [#allocation6], 1536
    $region21: #{tpu_custom_call.1} parent=1 // pred_fallthru
      _
    // Predicated region
    $region22: #{tpu_custom_call.1} parent=1 // pred_check
      _
    $region23: #{tpu_custom_call.1} parent=1 // pred_check_branch
      %62 = sbr.rel (0) target = $region25
    $region24: #{tpu_custom_call.1} parent=1 // pred_region
      %63 = dma.done [#allocation6], 1536
    $region25: #{tpu_custom_call.1} parent=1 // pred_fallthru
      _
    %s64 = sadd.s32 0, 0
    %s65 = smul.u32 12, %s64
    %s66 = sadd.s32 0, 0
    %s67 = smul.u32 12, %s66
    %p68 = scmp.eq.s32.totalorder 0, 0
    // Predicated region
    $region26: #{tpu_custom_call.1} parent=1 // pred_check
      %p69 = pneg %p68
    $region27: #{tpu_custom_call.1} parent=1 // pred_check_branch
      %71 = sbr.rel (%p69) target = $region29
    $region28: #{tpu_custom_call.1} parent=1 // pred_region
      %72 = vst [vmem:[#allocation8] sm:$0xff] 0.0
    $region29: #{tpu_custom_call.1} parent=1 // pred_fallthru
      _
    %v73 = vld [vmem:[#allocation5] sm:$0xff]
    %v74 = vld [vmem:[#allocation5 + $0x8] sm:$0xff]
    %v75 = vld [vmem:[#allocation5 + $0x10] sm:$0xff]
    %v76 = vld [vmem:[#allocation5 + $0x18] sm:$0xff]
    %v77 = vld [vmem:[#allocation5 + $0x20] sm:$0xff]
    %v78 = vld [vmem:[#allocation5 + $0x28] sm:$0xff]
    %v79 = vld [vmem:[#allocation5 + $0x30] sm:$0xff]
    %v80 = vld [vmem:[#allocation5 + $0x38] sm:$0xff]
    %v81 = vld [vmem:[#allocation5 + $0x40] sm:$0xff]
    %v82 = vld [vmem:[#allocation5 + $0x48] sm:$0xff]
    %v83 = vld [vmem:[#allocation5 + $0x50] sm:$0xff]
    %v84 = vld [vmem:[#allocation5 + $0x58] sm:$0xff]
    %v85 = vld [vmem:[#allocation2] sm:$0xff]
    %v86 = vld [vmem:[#allocation2 + $0x8] sm:$0xff]
    %v87 = vld [vmem:[#allocation2 + $0x10] sm:$0xff]
    %v88 = vld [vmem:[#allocation2 + $0x18] sm:$0xff]
    %v89 = vld [vmem:[#allocation2 + $0x20] sm:$0xff]
    %v90 = vld [vmem:[#allocation2 + $0x28] sm:$0xff]
    %v91 = vld [vmem:[#allocation2 + $0x30] sm:$0xff]
    %v92 = vld [vmem:[#allocation2 + $0x38] sm:$0xff]
    %v93 = vld [vmem:[#allocation2 + $0x40] sm:$0xff]
    %v94 = vld [vmem:[#allocation2 + $0x48] sm:$0xff]
    %v95 = vld [vmem:[#allocation2 + $0x50] sm:$0xff]
    %v96 = vld [vmem:[#allocation2 + $0x58] sm:$0xff]
    %v97 = vsub.f32 %v73, %v85
    %v98 = vsub.f32 %v74, %v86
    %v99 = vsub.f32 %v75, %v87
    %v100 = vsub.f32 %v76, %v88
    %v101 = vsub.f32 %v77, %v89
    %v102 = vsub.f32 %v78, %v90
    %v103 = vsub.f32 %v79, %v91
    %v104 = vsub.f32 %v80, %v92
    %v105 = vsub.f32 %v81, %v93
    %v106 = vsub.f32 %v82, %v94
    %v107 = vsub.f32 %v83, %v95
    %v108 = vsub.f32 %v84, %v96
    %v109 = vld [vmem:[#allocation7] sm:$0xff]
    %v110 = vld [vmem:[#allocation7 + $0x8] sm:$0xff]
    %v111 = vld [vmem:[#allocation7 + $0x10] sm:$0xff]
    %v112 = vld [vmem:[#allocation7 + $0x18] sm:$0xff]
    %v113 = vld [vmem:[#allocation7 + $0x20] sm:$0xff]
    %v114 = vld [vmem:[#allocation7 + $0x28] sm:$0xff]
    %v115 = vld [vmem:[#allocation7 + $0x30] sm:$0xff]
    %v116 = vld [vmem:[#allocation7 + $0x38] sm:$0xff]
    %v117 = vld [vmem:[#allocation7 + $0x40] sm:$0xff]
    %v118 = vld [vmem:[#allocation7 + $0x48] sm:$0xff]
    %v119 = vld [vmem:[#allocation7 + $0x50] sm:$0xff]
    %v120 = vld [vmem:[#allocation7 + $0x58] sm:$0xff]
    %v121 = vmul.f32 %v109, %v97
    %v122 = vmul.f32 %v110, %v98
    %v123 = vmul.f32 %v111, %v99
    %v124 = vmul.f32 %v112, %v100
    %v125 = vmul.f32 %v113, %v101
    %v126 = vmul.f32 %v114, %v102
    %v127 = vmul.f32 %v115, %v103
    %v128 = vmul.f32 %v116, %v104
    %v129 = vmul.f32 %v117, %v105
    %v130 = vmul.f32 %v118, %v106
    %v131 = vmul.f32 %v119, %v107
    %v132 = vmul.f32 %v120, %v108
    %v133 = vsub.f32 0.0, %v97
    %v134 = vsub.f32 0.0, %v98
    %v135 = vsub.f32 0.0, %v99
    %v136 = vsub.f32 0.0, %v100
    %v137 = vsub.f32 0.0, %v101
    %v138 = vsub.f32 0.0, %v102
    %v139 = vsub.f32 0.0, %v103
    %v140 = vsub.f32 0.0, %v104
    %v141 = vsub.f32 0.0, %v105
    %v142 = vsub.f32 0.0, %v106
    %v143 = vsub.f32 0.0, %v107
    %v144 = vsub.f32 0.0, %v108
    %v145 = vmax.f32 %v133, 0.0
    %v146 = vmax.f32 %v134, 0.0
    %v147 = vmax.f32 %v135, 0.0
    %v148 = vmax.f32 %v136, 0.0
    %v149 = vmax.f32 %v137, 0.0
    %v150 = vmax.f32 %v138, 0.0
    %v151 = vmax.f32 %v139, 0.0
    %v152 = vmax.f32 %v140, 0.0
    %v153 = vmax.f32 %v141, 0.0
    %v154 = vmax.f32 %v142, 0.0
    %v155 = vmax.f32 %v143, 0.0
    %v156 = vmax.f32 %v144, 0.0
    %v157 = vadd.f32 %v121, %v145
    %v158 = vadd.f32 %v122, %v146
    %v159 = vadd.f32 %v123, %v147
    %v160 = vadd.f32 %v124, %v148
    %v161 = vadd.f32 %v125, %v149
    %v162 = vadd.f32 %v126, %v150
    %v163 = vadd.f32 %v127, %v151
    %v164 = vadd.f32 %v128, %v152
    %v165 = vadd.f32 %v129, %v153
    %v166 = vadd.f32 %v130, %v154
    %v167 = vadd.f32 %v131, %v155
    %v168 = vadd.f32 %v132, %v156
    %v169 = vadd.f32 %v157, %v158
    %v170 = vadd.f32 %v169, %v159
    %v171 = vadd.f32 %v170, %v160
    %v172 = vadd.f32 %v171, %v161
    %v173 = vadd.f32 %v172, %v162
    %v174 = vadd.f32 %v173, %v163
    %v175 = vadd.f32 %v174, %v164
    %v176 = vadd.f32 %v175, %v165
    %v177 = vadd.f32 %v176, %v166
    %v178 = vadd.f32 %v177, %v167
    %v179 = vadd.f32 %v178, %v168
    %v180 = vld [vmem:[#allocation8] sm:$0xff]
    %v181 = vadd.f32 %v180, %v179
    %182 = vst [vmem:[#allocation8] sm:$0xff] %v181
    // Predicated region
    $region30: #{tpu_custom_call.1} parent=1 // pred_check
      _
    $region31: #{tpu_custom_call.1} parent=1 // pred_check_branch
      %184 = sbr.rel (0) target = $region33
    $region32: #{tpu_custom_call.1} parent=1 // pred_region
      %s186 = ssub.s32 128, 128
      %187 = vsyncadd [#allocation4], %s186
      %s189 = sshll.u32 [#allocation8], 4
      %s190 = int_to_ptr.vmem [resolvable:$true] %s189
      %192 = dma.vmem_to_hbm [thread:$0]  %s190, 128, %s3, [#allocation4]
    $region33: #{tpu_custom_call.1} parent=1 // pred_fallthru
      _
    // Predicated region
    $region34: #{tpu_custom_call.1} parent=1 // pred_check
      _
    $region35: #{tpu_custom_call.1} parent=1 // pred_check_branch
      %194 = sbr.rel (0) target = $region37
    $region36: #{tpu_custom_call.1} parent=1 // pred_region
      %195 = dma.done [#allocation4], 128
    $region37: #{tpu_custom_call.1} parent=1 // pred_fallthru
      _
    %196 = vsyncpa [#allocation3], 1
    %197 = vsyncpa [#allocation6], 1
    %198 = vsyncpa [#allocation4], 1

</llo_original>
